<compile_context>
chip_gen: v7x
topology: tpu7x:2x2x1
jax: 0.10.0
libtpu: 0.0.40
codegen_flags: <defaults>
</compile_context>

<pallas_src>
import jax
import jax.numpy as jnp
from jax import lax
from jax.experimental import pallas as pl
from jax.experimental.pallas import tpu as pltpu


def _embedding_dot_kernel(uidx_ref, iidx_ref, utab_t_ref, itab_t_ref, o_ref):
    """One batch tile: gather rows via one-hot MXU matmuls, reduce over D.

    uidx_ref, iidx_ref : (1, TB)  int32   VMEM (lane-dense index tiles)
    utab_t_ref         : (D, NU)  float32 VMEM (user table, pre-transposed)
    itab_t_ref         : (D, NI)  float32 VMEM (item table, pre-transposed)
    o_ref              : (1, TB)  float32 VMEM (lane-dense output tile)
    """
    _, nu = utab_t_ref.shape
    _, ni = itab_t_ref.shape
    tb = o_ref.shape[1]

    uidx = uidx_ref[...]                                   # (1, TB) int32
    iidx = iidx_ref[...]                                   # (1, TB) int32

    # One-hot selection matrices: column b has a single 1 at row idx[b];
    # invalid / padded indices give an all-zero column (score 0).
    u_oh = (lax.broadcasted_iota(jnp.int32, (nu, tb), 0) == uidx).astype(jnp.float32)
    i_oh = (lax.broadcasted_iota(jnp.int32, (ni, tb), 0) == iidx).astype(jnp.float32)

    # MXU gather: (D, N) @ (N, TB) -> (D, TB); embedding dim on sublanes,
    # batch on lanes.
    u = jnp.dot(utab_t_ref[...], u_oh, preferred_element_type=jnp.float32)
    v = jnp.dot(itab_t_ref[...], i_oh, preferred_element_type=jnp.float32)

    # Elementwise product (VPU) + cross-sublane reduction over D (XLU); the
    # (1, TB) result is lane-dense so writeback is a full unmasked vst.
    o_ref[...] = jnp.sum(u * v, axis=0, keepdims=True)


def _round_up(x: int, m: int) -> int:
    return ((x + m - 1) // m) * m


def embedding_scores(user_table, item_table, user_idx, item_idx, *, batch_tile=512):
    """scores[b] = <user_table[user_idx[b]], item_table[item_idx[b]]>."""
    num_users, d = user_table.shape
    num_items, d2 = item_table.shape
    assert d == d2, "user/item embedding dims must match"
    b = user_idx.shape[0]

    # Lane-dense batch tile: multiple of 128, no larger than needed.
    tb = max(128, min(_round_up(batch_tile, 128), _round_up(b, 128)))
    num_tiles = pl.cdiv(b, tb)
    padded_b = num_tiles * tb

    user_idx = user_idx.astype(jnp.int32)
    item_idx = item_idx.astype(jnp.int32)
    if padded_b != b:
        # Pad with -1: the one-hot column is all-zero, so padded lanes score 0
        # (they are sliced off below anyway).
        user_idx = jnp.pad(user_idx, (0, padded_b - b), constant_values=-1)
        item_idx = jnp.pad(item_idx, (0, padded_b - b), constant_values=-1)
    uidx2 = user_idx.reshape(num_tiles, tb)
    iidx2 = item_idx.reshape(num_tiles, tb)

    # Pre-transposed tables (D, N): kernel runs only standard MXU matmuls.
    utab_t = jnp.asarray(user_table, jnp.float32).T
    itab_t = jnp.asarray(item_table, jnp.float32).T

    out = pl.pallas_call(
        _embedding_dot_kernel,
        out_shape=jax.ShapeDtypeStruct((num_tiles, tb), jnp.float32),
        grid=(num_tiles,),
        in_specs=[
            pl.BlockSpec((1, tb), lambda t: (t, 0)),          # user index tile
            pl.BlockSpec((1, tb), lambda t: (t, 0)),          # item index tile
            # Whole tables VMEM-resident (tiny at these shapes); constant
            # block index -> fetched once, reused across batch tiles.
            pl.BlockSpec((d, num_users), lambda t: (0, 0)),
            pl.BlockSpec((d, num_items), lambda t: (0, 0)),
        ],
        out_specs=pl.BlockSpec((1, tb), lambda t: (t, 0)),
        compiler_params=pltpu.CompilerParams(
            # Batch tiles are fully independent (each output block written
            # exactly once) -> shardable across both TensorCores on v7x.
            dimension_semantics=("parallel",),
            # Explicit scoped-VMEM budget (raises v5e's 16 MiB default).
            vmem_limit_bytes=32 * 1024 * 1024,
        ),
    )(uidx2, iidx2, utab_t, itab_t)

    return out.reshape(padded_b)[:b]


if __name__ == "__main__":
    num_users, num_items, embedding_dim = 16, 32, 32
    batch = 8

    key = jax.random.PRNGKey(0)
    k1, k2, k3, k4 = jax.random.split(key, 4)

    # Deterministic params: normal(mean=0, std=0.01), matching the torch init.
    user_table = 0.01 * jax.random.normal(k1, (num_users, embedding_dim), jnp.float32)
    item_table = 0.01 * jax.random.normal(k2, (num_items, embedding_dim), jnp.float32)

    user_idx = jax.random.randint(k3, (batch,), 0, num_users, dtype=jnp.int32)
    item_idx = jax.random.randint(k4, (batch,), 0, num_items, dtype=jnp.int32)

    scores = embedding_scores(user_table, item_table, user_idx, item_idx)
    scores = jax.block_until_ready(scores)

    ref = jnp.sum(user_table[user_idx] * item_table[item_idx], axis=1)
    assert scores.shape == (batch,)
    assert scores.dtype == jnp.float32
    assert jnp.allclose(scores, ref, atol=1e-6, rtol=1e-6)
    print("KERNEL_OK")
</pallas_src>

<mosaic_0001>
module attributes {stable_mosaic.version = 11 : i64} {
  func.func @_embedding_dot_kernel(%arg0: i32, %arg1: memref<1x128xi32, #tpu.memory_space<vmem>>, %arg2: memref<1x128xi32, #tpu.memory_space<vmem>>, %arg3: memref<32x16xf32, #tpu.memory_space<vmem>>, %arg4: memref<32x32xf32, #tpu.memory_space<vmem>>, %arg5: memref<1x128xf32, #tpu.memory_space<vmem>>) attributes {dimension_semantics = [#tpu.dimension_semantics<parallel>], iteration_bounds = array<i64: 1>, scalar_prefetch = 0 : i64, scratch_operands = 0 : i64, tpu.core_type = #tpu.core_type<tc>, window_params = [{transform_indices = @transform_0, window_bounds = array<i64: 1, 128>}, {transform_indices = @transform_1, window_bounds = array<i64: 1, 128>}, {pipeline_mode = #tpu.pipeline_mode<synchronous>, transform_indices = @transform_2, window_bounds = array<i64: 32, 16>}, {pipeline_mode = #tpu.pipeline_mode<synchronous>, transform_indices = @transform_3, window_bounds = array<i64: 32, 32>}, {transform_indices = @transform_4, window_bounds = array<i64: 1, 128>}]} {
    %c0 = arith.constant 0 : index
    %c0_0 = arith.constant 0 : index
    %0 = vector.load %arg1[%c0, %c0_0] : memref<1x128xi32, #tpu.memory_space<vmem>>, vector<1x128xi32>
    %c0_1 = arith.constant 0 : index
    %c0_2 = arith.constant 0 : index
    %1 = vector.load %arg2[%c0_1, %c0_2] : memref<1x128xi32, #tpu.memory_space<vmem>>, vector<1x128xi32>
    %2 = tpu.iota {dimensions = array<i32: 0>} : vector<16x128xi32>
    %3 = vector.broadcast %0 : vector<1x128xi32> to vector<16x128xi32>
    %4 = arith.cmpi eq, %2, %3 : vector<16x128xi32>
    %5 = arith.extui %4 : vector<16x128xi1> to vector<16x128xi32>
    %6 = arith.sitofp %5 : vector<16x128xi32> to vector<16x128xf32>
    %7 = tpu.iota {dimensions = array<i32: 0>} : vector<32x128xi32>
    %8 = vector.broadcast %1 : vector<1x128xi32> to vector<32x128xi32>
    %9 = arith.cmpi eq, %7, %8 : vector<32x128xi32>
    %10 = arith.extui %9 : vector<32x128xi1> to vector<32x128xi32>
    %11 = arith.sitofp %10 : vector<32x128xi32> to vector<32x128xf32>
    %c0_3 = arith.constant 0 : index
    %c0_4 = arith.constant 0 : index
    %12 = vector.load %arg3[%c0_3, %c0_4] : memref<32x16xf32, #tpu.memory_space<vmem>>, vector<32x16xf32>
    %cst = arith.constant dense<0.000000e+00> : vector<32x128xf32>
    %13 = tpu.matmul %12, %6, %cst {dimension_numbers = #tpu.dot_dimension_numbers<[1], [0], [0], [1], [0, 0, 1, 1], [], []>} : vector<32x16xf32>, vector<16x128xf32>, vector<32x128xf32> -> vector<32x128xf32>
    %c0_5 = arith.constant 0 : index
    %c0_6 = arith.constant 0 : index
    %14 = vector.load %arg4[%c0_5, %c0_6] : memref<32x32xf32, #tpu.memory_space<vmem>>, vector<32x32xf32>
    %cst_7 = arith.constant dense<0.000000e+00> : vector<32x128xf32>
    %15 = tpu.matmul %14, %11, %cst_7 {dimension_numbers = #tpu.dot_dimension_numbers<[1], [0], [0], [1], [0, 0, 1, 1], [], []>} : vector<32x32xf32>, vector<32x128xf32>, vector<32x128xf32> -> vector<32x128xf32>
    %16 = arith.mulf %13, %15 : vector<32x128xf32>
    %cst_8 = arith.constant dense<0.000000e+00> : vector<128xf32>
    %17 = vector.multi_reduction <add>, %16, %cst_8 [0] : vector<32x128xf32> to vector<128xf32>
    %18 = vector.shape_cast %17 : vector<128xf32> to vector<1x128xf32>
    %c0_9 = arith.constant 0 : index
    %c0_10 = arith.constant 0 : index
    %19 = vector.load %arg5[%c0_9, %c0_10] : memref<1x128xf32, #tpu.memory_space<vmem>>, vector<1x128xf32>
    tpu.vector_store %arg5[%c0_9, %c0_10], %18 {strides = array<i32>} : memref<1x128xf32, #tpu.memory_space<vmem>>, vector<1x128xf32>,
    return
  }
  func.func @transform_0(%arg0: i32) -> (i32, i32) {
    %c0_i32 = arith.constant 0 : i32
    %c0_i32_0 = arith.constant 0 : i32
    return %arg0, %c0_i32 : i32, i32
  }
  func.func @transform_1(%arg0: i32) -> (i32, i32) {
    %c0_i32 = arith.constant 0 : i32
    %c0_i32_0 = arith.constant 0 : i32
    return %arg0, %c0_i32 : i32, i32
  }
  func.func @transform_2(%arg0: i32) -> (i32, i32) {
    %c0_i32 = arith.constant 0 : i32
    %c0_i32_0 = arith.constant 0 : i32
    %c0_i32_1 = arith.constant 0 : i32
    return %c0_i32, %c0_i32_0 : i32, i32
  }
  func.func @transform_3(%arg0: i32) -> (i32, i32) {
    %c0_i32 = arith.constant 0 : i32
    %c0_i32_0 = arith.constant 0 : i32
    %c0_i32_1 = arith.constant 0 : i32
    return %c0_i32, %c0_i32_0 : i32, i32
  }
  func.func @transform_4(%arg0: i32) -> (i32, i32) {
    %c0_i32 = arith.constant 0 : i32
    %c0_i32_0 = arith.constant 0 : i32
    return %arg0, %c0_i32 : i32, i32
  }
}

</mosaic_0001>

<llo_original>
// kernel: tpu_custom_call.1
$region0: #{tpu_custom_call.1}
  #allocation0 [shape = 'u32[]', space=smem, size = 0x4, offset = 0x4, fixed_abs, tag = 'smem constant byte address 0x4 - core index']
  #allocation1 [shape = 'u32[144,128]{1,0:T(1,128)}', space=vmem, size = 0x12000, scoped, tag = 'internal scratch']
  %s0 = inlined_call_operand.vmem [shape: s32[1,128], index: 0, kind: input, shape index: {}]
  %s1 = inlined_call_operand.vmem [shape: s32[1,128], index: 1, kind: input, shape index: {}]
  %s2 = inlined_call_operand.vmem [shape: f32[32,16], index: 2, kind: input, shape index: {}]
  %s3 = inlined_call_operand.vmem [shape: f32[32,32], index: 3, kind: input, shape index: {}]
  %s4 = inlined_call_operand.hbm [shape: f32[1,128], index: 4, kind: output, shape index: {}]
  %s5 = sld [smem:[#allocation0]]
  $region26: #{tpu_custom_call.1} parent=0
    _
  %s7 = ssub.s32 1, %s5
  %s8 = scalar_select 0, %s7, %s5
  $region1: #{tpu_custom_call.1} parent=0
    #allocation2 [shape = 'u8[512]{0}', space=vmem, size = 0x400, scoped, tag = 'output window, operand 0, single buffered']
    #allocation3 [shape = 's32[1]{0}', space=sflag, size = 0x4, scoped, tag = 'scoped memory for tpu_custom_call.1']
    %9 = vsyncpa [#allocation3], 0
    // Predicated region
    $region2: #{tpu_custom_call.1} parent=1 // pred_check
      _
    $region3: #{tpu_custom_call.1} parent=1 // pred_check_branch
      %11 = sbr.rel (0) target = $region5
    $region4: #{tpu_custom_call.1} parent=1 // pred_region
      _
    $region5: #{tpu_custom_call.1} parent=1 // pred_fallthru
      _
    // Predicated region
    $region6: #{tpu_custom_call.1} parent=1 // pred_check
      _
    $region7: #{tpu_custom_call.1} parent=1 // pred_check_branch
      %13 = sbr.rel (0) target = $region9
    $region8: #{tpu_custom_call.1} parent=1 // pred_region
      _
    $region9: #{tpu_custom_call.1} parent=1 // pred_fallthru
      _
    // Predicated region
    $region10: #{tpu_custom_call.1} parent=1 // pred_check
      _
    $region11: #{tpu_custom_call.1} parent=1 // pred_check_branch
      %15 = sbr.rel (0) target = $region13
    $region12: #{tpu_custom_call.1} parent=1 // pred_region
      _
    $region13: #{tpu_custom_call.1} parent=1 // pred_fallthru
      _
    // Predicated region
    $region14: #{tpu_custom_call.1} parent=1 // pred_check
      _
    $region15: #{tpu_custom_call.1} parent=1 // pred_check_branch
      %17 = sbr.rel (0) target = $region17
    $region16: #{tpu_custom_call.1} parent=1 // pred_region
      _
    $region17: #{tpu_custom_call.1} parent=1 // pred_fallthru
      _
    %v18 = vld [vmem:[%s0] sm:$0x1]
    %v19 = vld [vmem:[%s1] sm:$0x1]
    %v20 = vlaneseq
    %v21 = vshrl.u32 %v20, 7
    %v22 = vadd.s32 %v21, 8
    %v23 = vlaneseq
    %v24 = vshrl.u32 %v23, 7
    %v25 = vsub.s32 0, %v24
    %v26 = vrot.slane %v18, %v25
    %vm27 = vcmp.eq.s32.totalorder %v21, %v26
    %vm28 = vcmp.eq.s32.totalorder %v22, %v26
    %v29 = vsel %vm27, 1, 0
    %v30 = vsel %vm28, 1, 0
    %v31 = vcvt.s32.f32 %v29
    %v32 = vcvt.s32.f32 %v30
    %v33 = vadd.s32 %v21, 16
    %v34 = vadd.s32 %v21, 24
    %v35 = vlaneseq
    %v36 = vshrl.u32 %v35, 7
    %v37 = vsub.s32 0, %v36
    %v38 = vrot.slane %v19, %v37
    %vm39 = vcmp.eq.s32.totalorder %v21, %v38
    %vm40 = vcmp.eq.s32.totalorder %v22, %v38
    %vm41 = vcmp.eq.s32.totalorder %v33, %v38
    %vm42 = vcmp.eq.s32.totalorder %v34, %v38
    %v43 = vsel %vm39, 1, 0
    %v44 = vsel %vm40, 1, 0
    %v45 = vsel %vm41, 1, 0
    %v46 = vsel %vm42, 1, 0
    %v47 = vcvt.s32.f32 %v43
    %v48 = vcvt.s32.f32 %v44
    %v49 = vcvt.s32.f32 %v45
    %v50 = vcvt.s32.f32 %v46
    %v51 = vld [vmem:[%s2] sm:$0xff]
    %v52 = vld [vmem:[%s2 + $0x8] sm:$0xff]
    %v53 = vld [vmem:[%s2 + $0x10] sm:$0xff]
    %v54 = vld [vmem:[%s2 + $0x18] sm:$0xff]
    %vm55 = vcmask 130048
    %v57 = vsel %vm55, %v51, 0
    %v60 = vsel %vm55, %v52, 0
    %v63 = vsel %vm55, %v53, 0
    %v66 = vsel %vm55, %v54, 0
    %68 = vmatprep.subr.mxu0 0.0
    %69 = vmatpush1.msra.mxu0 %v31
    %70 = vmatprep.subr.mxu0 0.0
    %71 = vmatpush1.msra.mxu0 %v32
    %72 = vmatprep.subr.mxu0 0.0
    %73 = vmatpush1.msra.mxu0 0.0
    %74 = vmatprep.subr.mxu0 0.0
    %75 = vmatpush1.msra.mxu0 0.0
    %76 = vmatprep.subr.mxu0 0.0
    %77 = vmatpush1.msra.mxu0 0.0
    %78 = vmatprep.subr.mxu0 0.0
    %79 = vmatpush1.msra.mxu0 0.0
    %80 = vmatprep.subr.mxu0 0.0
    %81 = vmatpush1.msra.mxu0 0.0
    %82 = vmatprep.subr.mxu0 0.0
    %83 = vmatpush1.msra.mxu0 0.0
    %84 = vmatprep.subr.mxu0 0.0
    %85 = vmatpush1.msra.mxu0 0.0
    %86 = vmatprep.subr.mxu0 0.0
    %87 = vmatpush1.msra.mxu0 0.0
    %88 = vmatprep.subr.mxu0 0.0
    %89 = vmatpush1.msra.mxu0 0.0
    %90 = vmatprep.subr.mxu0 0.0
    %91 = vmatpush1.msra.mxu0 0.0
    %92 = vmatprep.subr.mxu0 0.0
    %93 = vmatpush1.msra.mxu0 0.0
    %94 = vmatprep.subr.mxu0 0.0
    %95 = vmatpush1.msra.mxu0 0.0
    %96 = vmatprep.subr.mxu0 0.0
    %97 = vmatpush1.msra.mxu0 0.0
    %98 = vmatprep.subr.mxu0 0.0
    %99 = vmatpush1.msra.mxu0 0.0
    %100 = vmatprep.subr.mxu0 0.0
    %101 = vmatpush1.msra.mxu0 0.0
    %102 = vmatprep.subr.mxu0 0.0
    %103 = vmatpush1.msra.mxu0 0.0
    %104 = vmatprep.subr.mxu0 0.0
    %105 = vmatpush1.msra.mxu0 0.0
    %106 = vmatprep.subr.mxu0 0.0
    %107 = vmatpush1.msra.mxu0 0.0
    %108 = vmatprep.subr.mxu0 0.0
    %109 = vmatpush1.msra.mxu0 0.0
    %110 = vmatprep.subr.mxu0 0.0
    %111 = vmatpush1.msra.mxu0 0.0
    %112 = vmatprep.subr.mxu0 0.0
    %113 = vmatpush1.msra.mxu0 0.0
    %114 = vmatprep.subr.mxu0 0.0
    %115 = vmatpush1.msra.mxu0 0.0
    %116 = vmatprep.subr.mxu0 0.0
    %117 = vmatpush1.msra.mxu0 0.0
    %118 = vmatprep.subr.mxu0 0.0
    %119 = vmatpush1.msra.mxu0 0.0
    %120 = vmatprep.subr.mxu0 0.0
    %121 = vmatpush1.msra.mxu0 0.0
    %122 = vmatprep.subr.mxu0 0.0
    %123 = vmatpush1.msra.mxu0 0.0
    %124 = vmatprep.subr.mxu0 0.0
    %125 = vmatpush1.msra.mxu0 0.0
    %126 = vmatprep.subr.mxu0 0.0
    %127 = vmatpush1.msra.mxu0 0.0
    %128 = vmatprep.subr.mxu0 0.0
    %129 = vmatpush1.msra.mxu0 0.0
    %130 = vmatprep.subr.mxu0 0.0
    %131 = vmatpush1.msra.mxu0 0.0
    %132 = vmatprep.mubr.f32.mxu0 0.0
    %133 = vmatmul.mubr.f32.gmra.mrb[0].mxu0 %v57
    %v134 = vpop.f32.mrb[0].mxu0
    %v135 = vadd.f32 0.0, %v134
    %v136 = vpop.f32.mrb[0].mxu0
    %137 = vmatprep.mubr.f32.mxu0 0.0
    %138 = vmatmul.mubr.f32.gmra.mrb[0].mxu0 %v60
    %v139 = vpop.f32.mrb[0].mxu0
    %v140 = vadd.f32 0.0, %v139
    %v141 = vpop.f32.mrb[0].mxu0
    %142 = vmatprep.mubr.f32.mxu0 0.0
    %143 = vmatmul.mubr.f32.gmra.mrb[0].mxu0 %v63
    %v144 = vpop.f32.mrb[0].mxu0
    %v145 = vadd.f32 0.0, %v144
    %v146 = vpop.f32.mrb[0].mxu0
    %147 = vmatprep.mubr.f32.mxu0 0.0
    %148 = vmatmul.mubr.f32.gmra.mrb[0].mxu0 %v66
    %v149 = vpop.f32.mrb[0].mxu0
    %v150 = vadd.f32 0.0, %v149
    %v151 = vpop.f32.mrb[0].mxu0
    %152 = vdwg.mxu0
    %v153 = vld [vmem:[%s3] sm:$0xff]
    %v154 = vld [vmem:[%s3 + $0x8] sm:$0xff]
    %v155 = vld [vmem:[%s3 + $0x10] sm:$0xff]
    %v156 = vld [vmem:[%s3 + $0x18] sm:$0xff]
    %vm157 = vcmask 261120
    %v159 = vsel %vm157, %v153, 0
    %v162 = vsel %vm157, %v154, 0
    %v165 = vsel %vm157, %v155, 0
    %v168 = vsel %vm157, %v156, 0
    %170 = vmatprep.subr.mxu0 0.0
    %171 = vmatpush1.msra.mxu0 %v47
    %172 = vmatprep.subr.mxu0 0.0
    %173 = vmatpush1.msra.mxu0 %v48
    %174 = vmatprep.subr.mxu0 0.0
    %175 = vmatpush1.msra.mxu0 %v49
    %176 = vmatprep.subr.mxu0 0.0
    %177 = vmatpush1.msra.mxu0 %v50
    %178 = vmatprep.subr.mxu0 0.0
    %179 = vmatpush1.msra.mxu0 0.0
    %180 = vmatprep.subr.mxu0 0.0
    %181 = vmatpush1.msra.mxu0 0.0
    %182 = vmatprep.subr.mxu0 0.0
    %183 = vmatpush1.msra.mxu0 0.0
    %184 = vmatprep.subr.mxu0 0.0
    %185 = vmatpush1.msra.mxu0 0.0
    %186 = vmatprep.subr.mxu0 0.0
    %187 = vmatpush1.msra.mxu0 0.0
    %188 = vmatprep.subr.mxu0 0.0
    %189 = vmatpush1.msra.mxu0 0.0
    %190 = vmatprep.subr.mxu0 0.0
    %191 = vmatpush1.msra.mxu0 0.0
    %192 = vmatprep.subr.mxu0 0.0
    %193 = vmatpush1.msra.mxu0 0.0
    %194 = vmatprep.subr.mxu0 0.0
    %195 = vmatpush1.msra.mxu0 0.0
    %196 = vmatprep.subr.mxu0 0.0
    %197 = vmatpush1.msra.mxu0 0.0
    %198 = vmatprep.subr.mxu0 0.0
    %199 = vmatpush1.msra.mxu0 0.0
    %200 = vmatprep.subr.mxu0 0.0
    %201 = vmatpush1.msra.mxu0 0.0
    %202 = vmatprep.subr.mxu0 0.0
    %203 = vmatpush1.msra.mxu0 0.0
    %204 = vmatprep.subr.mxu0 0.0
    %205 = vmatpush1.msra.mxu0 0.0
    %206 = vmatprep.subr.mxu0 0.0
    %207 = vmatpush1.msra.mxu0 0.0
    %208 = vmatprep.subr.mxu0 0.0
    %209 = vmatpush1.msra.mxu0 0.0
    %210 = vmatprep.subr.mxu0 0.0
    %211 = vmatpush1.msra.mxu0 0.0
    %212 = vmatprep.subr.mxu0 0.0
    %213 = vmatpush1.msra.mxu0 0.0
    %214 = vmatprep.subr.mxu0 0.0
    %215 = vmatpush1.msra.mxu0 0.0
    %216 = vmatprep.subr.mxu0 0.0
    %217 = vmatpush1.msra.mxu0 0.0
    %218 = vmatprep.subr.mxu0 0.0
    %219 = vmatpush1.msra.mxu0 0.0
    %220 = vmatprep.subr.mxu0 0.0
    %221 = vmatpush1.msra.mxu0 0.0
    %222 = vmatprep.subr.mxu0 0.0
    %223 = vmatpush1.msra.mxu0 0.0
    %224 = vmatprep.subr.mxu0 0.0
    %225 = vmatpush1.msra.mxu0 0.0
    %226 = vmatprep.subr.mxu0 0.0
    %227 = vmatpush1.msra.mxu0 0.0
    %228 = vmatprep.subr.mxu0 0.0
    %229 = vmatpush1.msra.mxu0 0.0
    %230 = vmatprep.subr.mxu0 0.0
    %231 = vmatpush1.msra.mxu0 0.0
    %232 = vmatprep.subr.mxu0 0.0
    %233 = vmatpush1.msra.mxu0 0.0
    %234 = vmatprep.mubr.f32.mxu0 0.0
    %235 = vmatmul.mubr.f32.gmra.mrb[0].mxu0 %v159
    %v236 = vpop.f32.mrb[0].mxu0
    %v237 = vadd.f32 0.0, %v236
    %v238 = vpop.f32.mrb[0].mxu0
    %239 = vmatprep.mubr.f32.mxu0 0.0
    %240 = vmatmul.mubr.f32.gmra.mrb[0].mxu0 %v162
    %v241 = vpop.f32.mrb[0].mxu0
    %v242 = vadd.f32 0.0, %v241
    %v243 = vpop.f32.mrb[0].mxu0
    %244 = vmatprep.mubr.f32.mxu0 0.0
    %245 = vmatmul.mubr.f32.gmra.mrb[0].mxu0 %v165
    %v246 = vpop.f32.mrb[0].mxu0
    %v247 = vadd.f32 0.0, %v246
    %v248 = vpop.f32.mrb[0].mxu0
    %249 = vmatprep.mubr.f32.mxu0 0.0
    %250 = vmatmul.mubr.f32.gmra.mrb[0].mxu0 %v168
    %v251 = vpop.f32.mrb[0].mxu0
    %v252 = vadd.f32 0.0, %v251
    %v253 = vpop.f32.mrb[0].mxu0
    %254 = vdwg.mxu0
    %v255 = vmul.f32 %v135, %v237
    %v256 = vmul.f32 %v140, %v242
    %v257 = vmul.f32 %v145, %v247
    %v258 = vmul.f32 %v150, %v252
    %v259 = vadd.f32 %v255, %v256
    %v260 = vadd.f32 %v259, %v257
    %v261 = vadd.f32 %v260, %v258
    %v262 = vrot.slane %v261, 4
    %v263 = vadd.f32 %v261, %v262
    %v264 = vrot.slane %v263, 2
    %v265 = vadd.f32 %v263, %v264
    %v266 = vrot.slane %v265, 1
    %v267 = vadd.f32 %v265, %v266
    %268 = vst [vmem:[#allocation2] sm:$0x1] %v267
    // Predicated region
    $region18: #{tpu_custom_call.1} parent=1 // pred_check
      _
    $region19: #{tpu_custom_call.1} parent=1 // pred_check_branch
      %270 = sbr.rel (0) target = $region21
    $region20: #{tpu_custom_call.1} parent=1 // pred_region
      %s272 = ssub.s32 16, 16
      %273 = vsyncadd [#allocation3], %s272
      %s275 = sshll.u32 [#allocation2], 4
      %s276 = int_to_ptr.vmem [resolvable:$true] %s275
      %278 = dma.vmem_to_hbm [thread:$0]  %s276, 16, %s4, [#allocation3]
    $region21: #{tpu_custom_call.1} parent=1 // pred_fallthru
      _
    // Predicated region
    $region22: #{tpu_custom_call.1} parent=1 // pred_check
      _
    $region23: #{tpu_custom_call.1} parent=1 // pred_check_branch
      %280 = sbr.rel (0) target = $region25
    $region24: #{tpu_custom_call.1} parent=1 // pred_region
      %281 = dma.done [#allocation3], 16
    $region25: #{tpu_custom_call.1} parent=1 // pred_fallthru
      _
    %282 = vsyncpa [#allocation3], 1

</llo_original>
